<compile_context>
chip_gen: v6e
topology: v6e:2x2x1
jax: 0.10.0
libtpu: 0.0.40
codegen_flags: <defaults>
</compile_context>

<pallas_src>
import functools

import jax
import jax.numpy as jnp
import numpy as np
from jax import lax
from jax.experimental import pallas as pl
from jax.experimental.pallas import tpu as pltpu


def _convlstm_cell_kernel(x_ref, w_ref, b_ref, mask_ref, c_ref,
                          h_out_ref, c_out_ref, xcol_ref, *,
                          offsets, hw, hidden_dim):
    """One batch element per grid step (channel-first, HW on lanes).

    x_ref:     (1, Cp, HWp)    combined [x, h] flattened + lane-padded
    w_ref:     (4*Hd, K*Cp)    conv weight, channel-padded, transposed
    b_ref:     (4*Hd, 1)       conv bias (broadcasts over lanes)
    mask_ref:  (K, 1, HW)      per-tap validity mask ("same" padding)
    c_ref:     (1, Hd, HW)     current cell state
    h_out_ref: (1, Hd, HW)     next hidden state
    c_out_ref: (1, Hd, HW)     next cell state
    xcol_ref:  (K*Cp, HW)      VMEM im2col staging buffer
    """
    cp = x_ref.shape[1]
    hd = hidden_dim

    # Build the im2col matrix for this image: one aligned (Cp, HW) block per
    # kernel tap, produced by a static lane-offset slice of the padded slab.
    xfull = x_ref[0]                                       # (Cp, HWp), 1 load
    for k, off in enumerate(offsets):                      # static, unrolled
        xk = xfull[:, off:off + hw] * mask_ref[k]          # (Cp, HW)
        xcol_ref[k * cp:(k + 1) * cp, :] = xk

    # Entire convolution as one MXU matmul (contraction depth K*Cp).
    z = jnp.dot(w_ref[...], xcol_ref[...],
                preferred_element_type=jnp.float32)        # (4*Hd, HW)
    z = z + b_ref[...].astype(jnp.float32)

    # Gates: aligned sublane slices; elementwise math in f32.
    i = jax.nn.sigmoid(z[0 * hd:1 * hd])
    f = jax.nn.sigmoid(z[1 * hd:2 * hd])
    o = jax.nn.sigmoid(z[2 * hd:3 * hd])
    g = jnp.tanh(z[3 * hd:4 * hd])

    c_cur = c_ref[0].astype(jnp.float32)                   # (Hd, HW)
    c_next = f * c_cur + i * g
    h_next = o * jnp.tanh(c_next)

    c_out_ref[0] = c_next.astype(c_out_ref.dtype)
    h_out_ref[0] = h_next.astype(h_out_ref.dtype)


def convlstm_cell(x, h_cur, c_cur, weight, bias, kernel_size):
    """ConvLSTMCell.forward with PyTorch-native NCHW tensors / OIHW weight.

    x: (B, Cin, H, W), h_cur/c_cur: (B, Hd, H, W)
    weight: (4*Hd, Cin+Hd, KH, KW), bias: (4*Hd,)
    Returns (h_next, c_next), each (B, Hd, H, W).
    """
    B, Cin, H, W = x.shape
    Hd = h_cur.shape[1]
    KH, KW = kernel_size
    ph, pw = KH // 2, KW // 2
    K = KH * KW
    Cc = Cin + Hd
    Cp = ((Cc + 7) // 8) * 8          # round channels up to a sublane multiple
    HW = H * W
    pad_amt = ph * W + pw             # flat lane padding covering all taps
    HWp = HW + 2 * pad_amt
    dtype = x.dtype

    # ---- glue: single small lane-padded slab (no K-duplicated im2col) -----
    combined = jnp.concatenate([x, h_cur], axis=1).reshape(B, Cc, HW)
    x_pad = jnp.pad(combined, ((0, 0), (0, Cp - Cc), (pad_amt, pad_amt)))
    c_flat = c_cur.reshape(B, Hd, HW)

    # Weight (4Hd, Cc, KH, KW) -> lane-dense (4Hd, K*Cp), zero-padded channels.
    w_t = jnp.transpose(weight, (2, 3, 1, 0))               # (KH, KW, Cc, 4Hd)
    w_t = jnp.pad(w_t, ((0, 0), (0, 0), (0, Cp - Cc), (0, 0)))
    w_t = jnp.transpose(w_t.reshape(K * Cp, 4 * Hd), (1, 0)).astype(dtype)
    b_col = bias.reshape(4 * Hd, 1).astype(dtype)

    # Static per-tap lane offsets and boundary-validity masks ("same" pad).
    ys, xs = np.divmod(np.arange(HW), W)
    offsets = []
    mask_np = np.zeros((K, 1, HW), np.float32)
    k = 0
    for ky in range(KH):
        for kx in range(KW):
            dy, dx = ky - ph, kx - pw
            mask_np[k, 0] = ((ys + dy >= 0) & (ys + dy < H) &
                             (xs + dx >= 0) & (xs + dx < W))
            offsets.append(pad_amt + dy * W + dx)
            k += 1
    mask = jnp.asarray(mask_np, dtype=dtype)

    kernel = functools.partial(_convlstm_cell_kernel,
                               offsets=tuple(offsets), hw=HW, hidden_dim=Hd)

    # Per-step VMEM: ~Cp*HWp*4 (double-buffered) + K*Cp*HW*4 scratch — well
    # under the v7x 64 MiB limit even at much larger H, W (no 9x duplication).
    h_next, c_next = pl.pallas_call(
        kernel,
        out_shape=(
            jax.ShapeDtypeStruct((B, Hd, HW), dtype),
            jax.ShapeDtypeStruct((B, Hd, HW), dtype),
        ),
        grid_spec=pltpu.PrefetchScalarGridSpec(
            num_scalar_prefetch=0,
            grid=(B,),
            in_specs=[
                pl.BlockSpec((1, Cp, HWp), lambda b: (b, 0, 0)),
                pl.BlockSpec((4 * Hd, K * Cp), lambda b: (0, 0)),
                pl.BlockSpec((4 * Hd, 1), lambda b: (0, 0)),
                pl.BlockSpec((K, 1, HW), lambda b: (0, 0, 0)),
                pl.BlockSpec((1, Hd, HW), lambda b: (b, 0, 0)),
            ],
            out_specs=[
                pl.BlockSpec((1, Hd, HW), lambda b: (b, 0, 0)),
                pl.BlockSpec((1, Hd, HW), lambda b: (b, 0, 0)),
            ],
            scratch_shapes=[pltpu.VMEM((K * Cp, HW), dtype)],
        ),
        compiler_params=pltpu.CompilerParams(
            dimension_semantics=("parallel",)
        ),
    )(x_pad, w_t, b_col, mask, c_flat)

    return h_next.reshape(B, Hd, H, W), c_next.reshape(B, Hd, H, W)


def _reference_forward(x, h_cur, c_cur, weight, bias):
    """Pure-JAX reference mirroring the PyTorch module (NCHW / OIHW)."""
    combined = jnp.concatenate([x, h_cur], axis=1)
    conv = lax.conv_general_dilated(
        combined, weight, window_strides=(1, 1), padding="SAME",
        dimension_numbers=("NCHW", "OIHW", "NCHW"),
    ) + bias[None, :, None, None]
    cc_i, cc_f, cc_o, cc_g = jnp.split(conv, 4, axis=1)
    i = jax.nn.sigmoid(cc_i)
    f = jax.nn.sigmoid(cc_f)
    o = jax.nn.sigmoid(cc_o)
    g = jnp.tanh(cc_g)
    c_next = f * c_cur + i * g
    h_next = o * jnp.tanh(c_next)
    return h_next, c_next


if __name__ == "__main__":
    # Module config: ConvLSTMCell(input_dim=4, hidden_dim=8, kernel_size=(3,3), bias=True)
    B, Hs, Ws = 2, 16, 16
    input_dim, hidden_dim = 4, 8
    kernel_size = (3, 3)
    Cc = input_dim + hidden_dim

    key = jax.random.PRNGKey(0)
    kx, kh, kc, kw, kb = jax.random.split(key, 5)

    # PyTorch-layout parameters: conv weight is OIHW, bias (4*hidden_dim,).
    weight = 0.1 * jax.random.normal(
        kw, (4 * hidden_dim, Cc, kernel_size[0], kernel_size[1]), jnp.float32)
    bias = 0.1 * jax.random.normal(kb, (4 * hidden_dim,), jnp.float32)

    # Inputs in NCHW, matching the PyTorch module.
    x = jax.random.normal(kx, (B, input_dim, Hs, Ws), jnp.float32)
    h_cur = jax.random.normal(kh, (B, hidden_dim, Hs, Ws), jnp.float32)
    c_cur = jax.random.normal(kc, (B, hidden_dim, Hs, Ws), jnp.float32)

    h_next, c_next = convlstm_cell(x, h_cur, c_cur, weight, bias, kernel_size)
    jax.block_until_ready((h_next, c_next))

    h_ref, c_ref = _reference_forward(x, h_cur, c_cur, weight, bias)
    np.testing.assert_allclose(np.asarray(h_next), np.asarray(h_ref),
                               rtol=1e-5, atol=1e-5)
    np.testing.assert_allclose(np.asarray(c_next), np.asarray(c_ref),
                               rtol=1e-5, atol=1e-5)

    print("KERNEL_OK")
</pallas_src>

<mosaic_0001>
module attributes {stable_mosaic.version = 11 : i64} {
  func.func @_convlstm_cell_kernel(%arg0: i32, %arg1: memref<1x16x290xf32, #tpu.memory_space<vmem>>, %arg2: memref<32x144xf32, #tpu.memory_space<vmem>>, %arg3: memref<32x1xf32, #tpu.memory_space<vmem>>, %arg4: memref<9x1x256xf32, #tpu.memory_space<vmem>>, %arg5: memref<1x8x256xf32, #tpu.memory_space<vmem>>, %arg6: memref<1x8x256xf32, #tpu.memory_space<vmem>>, %arg7: memref<1x8x256xf32, #tpu.memory_space<vmem>>, %arg8: memref<144x256xf32, #tpu.memory_space<vmem>>) attributes {dimension_semantics = [#tpu.dimension_semantics<parallel>], iteration_bounds = array<i64: 2>, scalar_prefetch = 0 : i64, scratch_operands = 1 : i64, tpu.core_type = #tpu.core_type<tc>, window_params = [{transform_indices = @transform_0, window_bounds = array<i64: 1, 16, 290>}, {pipeline_mode = #tpu.pipeline_mode<synchronous>, transform_indices = @transform_1, window_bounds = array<i64: 32, 144>}, {pipeline_mode = #tpu.pipeline_mode<synchronous>, transform_indices = @transform_2, window_bounds = array<i64: 32, 1>}, {pipeline_mode = #tpu.pipeline_mode<synchronous>, transform_indices = @transform_3, window_bounds = array<i64: 9, 1, 256>}, {transform_indices = @transform_4, window_bounds = array<i64: 1, 8, 256>}, {transform_indices = @transform_5, window_bounds = array<i64: 1, 8, 256>}, {transform_indices = @transform_6, window_bounds = array<i64: 1, 8, 256>}]} {
    %c0 = arith.constant 0 : index
    %c0_0 = arith.constant 0 : index
    %c0_1 = arith.constant 0 : index
    %0 = vector.load %arg1[%c0, %c0_0, %c0_1] : memref<1x16x290xf32, #tpu.memory_space<vmem>>, vector<1x16x290xf32>
    %1 = vector.shape_cast %0 : vector<1x16x290xf32> to vector<16x290xf32>
    %2 = vector.extract_strided_slice %1 {offsets = [0, 0], sizes = [16, 256], strides = [1, 1]} : vector<16x290xf32> to vector<16x256xf32>
    %c0_2 = arith.constant 0 : index
    %c0_3 = arith.constant 0 : index
    %c0_4 = arith.constant 0 : index
    %3 = vector.load %arg4[%c0_2, %c0_3, %c0_4] : memref<9x1x256xf32, #tpu.memory_space<vmem>>, vector<1x1x256xf32>
    %4 = vector.shape_cast %3 : vector<1x1x256xf32> to vector<1x256xf32>
    %5 = vector.broadcast %4 : vector<1x256xf32> to vector<16x256xf32>
    %6 = arith.mulf %2, %5 : vector<16x256xf32>
    %c0_5 = arith.constant 0 : index
    %c0_6 = arith.constant 0 : index
    %7 = vector.load %arg8[%c0_5, %c0_6] : memref<144x256xf32, #tpu.memory_space<vmem>>, vector<16x256xf32>
    tpu.vector_store %arg8[%c0_5, %c0_6], %6 {strides = array<i32>} : memref<144x256xf32, #tpu.memory_space<vmem>>, vector<16x256xf32>,
    %8 = vector.extract_strided_slice %1 {offsets = [0, 1], sizes = [16, 256], strides = [1, 1]} : vector<16x290xf32> to vector<16x256xf32>
    %c1 = arith.constant 1 : index
    %c0_7 = arith.constant 0 : index
    %c0_8 = arith.constant 0 : index
    %9 = vector.load %arg4[%c1, %c0_7, %c0_8] : memref<9x1x256xf32, #tpu.memory_space<vmem>>, vector<1x1x256xf32>
    %10 = vector.shape_cast %9 : vector<1x1x256xf32> to vector<1x256xf32>
    %11 = vector.broadcast %10 : vector<1x256xf32> to vector<16x256xf32>
    %12 = arith.mulf %8, %11 : vector<16x256xf32>
    %c16 = arith.constant 16 : index
    %c0_9 = arith.constant 0 : index
    %13 = vector.load %arg8[%c16, %c0_9] : memref<144x256xf32, #tpu.memory_space<vmem>>, vector<16x256xf32>
    tpu.vector_store %arg8[%c16, %c0_9], %12 {strides = array<i32>} : memref<144x256xf32, #tpu.memory_space<vmem>>, vector<16x256xf32>,
    %14 = vector.extract_strided_slice %1 {offsets = [0, 2], sizes = [16, 256], strides = [1, 1]} : vector<16x290xf32> to vector<16x256xf32>
    %c2 = arith.constant 2 : index
    %c0_10 = arith.constant 0 : index
    %c0_11 = arith.constant 0 : index
    %15 = vector.load %arg4[%c2, %c0_10, %c0_11] : memref<9x1x256xf32, #tpu.memory_space<vmem>>, vector<1x1x256xf32>
    %16 = vector.shape_cast %15 : vector<1x1x256xf32> to vector<1x256xf32>
    %17 = vector.broadcast %16 : vector<1x256xf32> to vector<16x256xf32>
    %18 = arith.mulf %14, %17 : vector<16x256xf32>
    %c32 = arith.constant 32 : index
    %c0_12 = arith.constant 0 : index
    %19 = vector.load %arg8[%c32, %c0_12] : memref<144x256xf32, #tpu.memory_space<vmem>>, vector<16x256xf32>
    tpu.vector_store %arg8[%c32, %c0_12], %18 {strides = array<i32>} : memref<144x256xf32, #tpu.memory_space<vmem>>, vector<16x256xf32>,
    %20 = vector.extract_strided_slice %1 {offsets = [0, 16], sizes = [16, 256], strides = [1, 1]} : vector<16x290xf32> to vector<16x256xf32>
    %c3 = arith.constant 3 : index
    %c0_13 = arith.constant 0 : index
    %c0_14 = arith.constant 0 : index
    %21 = vector.load %arg4[%c3, %c0_13, %c0_14] : memref<9x1x256xf32, #tpu.memory_space<vmem>>, vector<1x1x256xf32>
    %22 = vector.shape_cast %21 : vector<1x1x256xf32> to vector<1x256xf32>
    %23 = vector.broadcast %22 : vector<1x256xf32> to vector<16x256xf32>
    %24 = arith.mulf %20, %23 : vector<16x256xf32>
    %c48 = arith.constant 48 : index
    %c0_15 = arith.constant 0 : index
    %25 = vector.load %arg8[%c48, %c0_15] : memref<144x256xf32, #tpu.memory_space<vmem>>, vector<16x256xf32>
    tpu.vector_store %arg8[%c48, %c0_15], %24 {strides = array<i32>} : memref<144x256xf32, #tpu.memory_space<vmem>>, vector<16x256xf32>,
    %26 = vector.extract_strided_slice %1 {offsets = [0, 17], sizes = [16, 256], strides = [1, 1]} : vector<16x290xf32> to vector<16x256xf32>
    %c4 = arith.constant 4 : index
    %c0_16 = arith.constant 0 : index
    %c0_17 = arith.constant 0 : index
    %27 = vector.load %arg4[%c4, %c0_16, %c0_17] : memref<9x1x256xf32, #tpu.memory_space<vmem>>, vector<1x1x256xf32>
    %28 = vector.shape_cast %27 : vector<1x1x256xf32> to vector<1x256xf32>
    %29 = vector.broadcast %28 : vector<1x256xf32> to vector<16x256xf32>
    %30 = arith.mulf %26, %29 : vector<16x256xf32>
    %c64 = arith.constant 64 : index
    %c0_18 = arith.constant 0 : index
    %31 = vector.load %arg8[%c64, %c0_18] : memref<144x256xf32, #tpu.memory_space<vmem>>, vector<16x256xf32>
    tpu.vector_store %arg8[%c64, %c0_18], %30 {strides = array<i32>} : memref<144x256xf32, #tpu.memory_space<vmem>>, vector<16x256xf32>,
    %32 = vector.extract_strided_slice %1 {offsets = [0, 18], sizes = [16, 256], strides = [1, 1]} : vector<16x290xf32> to vector<16x256xf32>
    %c5 = arith.constant 5 : index
    %c0_19 = arith.constant 0 : index
    %c0_20 = arith.constant 0 : index
    %33 = vector.load %arg4[%c5, %c0_19, %c0_20] : memref<9x1x256xf32, #tpu.memory_space<vmem>>, vector<1x1x256xf32>
    %34 = vector.shape_cast %33 : vector<1x1x256xf32> to vector<1x256xf32>
    %35 = vector.broadcast %34 : vector<1x256xf32> to vector<16x256xf32>
    %36 = arith.mulf %32, %35 : vector<16x256xf32>
    %c80 = arith.constant 80 : index
    %c0_21 = arith.constant 0 : index
    %37 = vector.load %arg8[%c80, %c0_21] : memref<144x256xf32, #tpu.memory_space<vmem>>, vector<16x256xf32>
    tpu.vector_store %arg8[%c80, %c0_21], %36 {strides = array<i32>} : memref<144x256xf32, #tpu.memory_space<vmem>>, vector<16x256xf32>,
    %38 = vector.extract_strided_slice %1 {offsets = [0, 32], sizes = [16, 256], strides = [1, 1]} : vector<16x290xf32> to vector<16x256xf32>
    %c6 = arith.constant 6 : index
    %c0_22 = arith.constant 0 : index
    %c0_23 = arith.constant 0 : index
    %39 = vector.load %arg4[%c6, %c0_22, %c0_23] : memref<9x1x256xf32, #tpu.memory_space<vmem>>, vector<1x1x256xf32>
    %40 = vector.shape_cast %39 : vector<1x1x256xf32> to vector<1x256xf32>
    %41 = vector.broadcast %40 : vector<1x256xf32> to vector<16x256xf32>
    %42 = arith.mulf %38, %41 : vector<16x256xf32>
    %c96 = arith.constant 96 : index
    %c0_24 = arith.constant 0 : index
    %43 = vector.load %arg8[%c96, %c0_24] : memref<144x256xf32, #tpu.memory_space<vmem>>, vector<16x256xf32>
    tpu.vector_store %arg8[%c96, %c0_24], %42 {strides = array<i32>} : memref<144x256xf32, #tpu.memory_space<vmem>>, vector<16x256xf32>,
    %44 = vector.extract_strided_slice %1 {offsets = [0, 33], sizes = [16, 256], strides = [1, 1]} : vector<16x290xf32> to vector<16x256xf32>
    %c7 = arith.constant 7 : index
    %c0_25 = arith.constant 0 : index
    %c0_26 = arith.constant 0 : index
    %45 = vector.load %arg4[%c7, %c0_25, %c0_26] : memref<9x1x256xf32, #tpu.memory_space<vmem>>, vector<1x1x256xf32>
    %46 = vector.shape_cast %45 : vector<1x1x256xf32> to vector<1x256xf32>
    %47 = vector.broadcast %46 : vector<1x256xf32> to vector<16x256xf32>
    %48 = arith.mulf %44, %47 : vector<16x256xf32>
    %c112 = arith.constant 112 : index
    %c0_27 = arith.constant 0 : index
    %49 = vector.load %arg8[%c112, %c0_27] : memref<144x256xf32, #tpu.memory_space<vmem>>, vector<16x256xf32>
    tpu.vector_store %arg8[%c112, %c0_27], %48 {strides = array<i32>} : memref<144x256xf32, #tpu.memory_space<vmem>>, vector<16x256xf32>,
    %50 = vector.extract_strided_slice %1 {offsets = [0, 34], sizes = [16, 256], strides = [1, 1]} : vector<16x290xf32> to vector<16x256xf32>
    %c8 = arith.constant 8 : index
    %c0_28 = arith.constant 0 : index
    %c0_29 = arith.constant 0 : index
    %51 = vector.load %arg4[%c8, %c0_28, %c0_29] : memref<9x1x256xf32, #tpu.memory_space<vmem>>, vector<1x1x256xf32>
    %52 = vector.shape_cast %51 : vector<1x1x256xf32> to vector<1x256xf32>
    %53 = vector.broadcast %52 : vector<1x256xf32> to vector<16x256xf32>
    %54 = arith.mulf %50, %53 : vector<16x256xf32>
    %c128 = arith.constant 128 : index
    %c0_30 = arith.constant 0 : index
    %55 = vector.load %arg8[%c128, %c0_30] : memref<144x256xf32, #tpu.memory_space<vmem>>, vector<16x256xf32>
    tpu.vector_store %arg8[%c128, %c0_30], %54 {strides = array<i32>} : memref<144x256xf32, #tpu.memory_space<vmem>>, vector<16x256xf32>,
    %c0_31 = arith.constant 0 : index
    %c0_32 = arith.constant 0 : index
    %56 = vector.load %arg2[%c0_31, %c0_32] : memref<32x144xf32, #tpu.memory_space<vmem>>, vector<32x144xf32>
    %c0_33 = arith.constant 0 : index
    %c0_34 = arith.constant 0 : index
    %57 = vector.load %arg8[%c0_33, %c0_34] : memref<144x256xf32, #tpu.memory_space<vmem>>, vector<144x256xf32>
    %cst = arith.constant dense<0.000000e+00> : vector<32x256xf32>
    %58 = tpu.matmul %56, %57, %cst {dimension_numbers = #tpu.dot_dimension_numbers<[1], [0], [0], [1], [0, 0, 1, 1], [], []>} : vector<32x144xf32>, vector<144x256xf32>, vector<32x256xf32> -> vector<32x256xf32>
    %c0_35 = arith.constant 0 : index
    %c0_36 = arith.constant 0 : index
    %59 = vector.load %arg3[%c0_35, %c0_36] : memref<32x1xf32, #tpu.memory_space<vmem>>, vector<32x1xf32>
    %60 = vector.broadcast %59 : vector<32x1xf32> to vector<32x256xf32>
    %61 = arith.addf %58, %60 : vector<32x256xf32>
    %62 = vector.extract_strided_slice %61 {offsets = [0, 0], sizes = [8, 256], strides = [1, 1]} : vector<32x256xf32> to vector<8x256xf32>
    %63 = arith.negf %62 : vector<8x256xf32>
    %64 = math.exp %63 : vector<8x256xf32>
    %cst_37 = arith.constant 1.000000e+00 : f32
    %65 = vector.broadcast %cst_37 : f32 to vector<8x256xf32>
    %66 = arith.addf %65, %64 : vector<8x256xf32>
    %67 = arith.divf %65, %66 : vector<8x256xf32>
    %68 = vector.extract_strided_slice %61 {offsets = [8, 0], sizes = [8, 256], strides = [1, 1]} : vector<32x256xf32> to vector<8x256xf32>
    %69 = arith.negf %68 : vector<8x256xf32>
    %70 = math.exp %69 : vector<8x256xf32>
    %cst_38 = arith.constant 1.000000e+00 : f32
    %71 = vector.broadcast %cst_38 : f32 to vector<8x256xf32>
    %72 = arith.addf %71, %70 : vector<8x256xf32>
    %73 = arith.divf %71, %72 : vector<8x256xf32>
    %74 = vector.extract_strided_slice %61 {offsets = [16, 0], sizes = [8, 256], strides = [1, 1]} : vector<32x256xf32> to vector<8x256xf32>
    %75 = arith.negf %74 : vector<8x256xf32>
    %76 = math.exp %75 : vector<8x256xf32>
    %cst_39 = arith.constant 1.000000e+00 : f32
    %77 = vector.broadcast %cst_39 : f32 to vector<8x256xf32>
    %78 = arith.addf %77, %76 : vector<8x256xf32>
    %79 = arith.divf %77, %78 : vector<8x256xf32>
    %80 = vector.extract_strided_slice %61 {offsets = [24, 0], sizes = [8, 256], strides = [1, 1]} : vector<32x256xf32> to vector<8x256xf32>
    %81 = math.tanh %80 : vector<8x256xf32>
    %c0_40 = arith.constant 0 : index
    %c0_41 = arith.constant 0 : index
    %c0_42 = arith.constant 0 : index
    %82 = vector.load %arg5[%c0_40, %c0_41, %c0_42] : memref<1x8x256xf32, #tpu.memory_space<vmem>>, vector<1x8x256xf32>
    %83 = vector.shape_cast %82 : vector<1x8x256xf32> to vector<8x256xf32>
    %84 = arith.mulf %73, %83 : vector<8x256xf32>
    %85 = arith.mulf %67, %81 : vector<8x256xf32>
    %86 = arith.addf %84, %85 : vector<8x256xf32>
    %87 = math.tanh %86 : vector<8x256xf32>
    %88 = arith.mulf %79, %87 : vector<8x256xf32>
    %c0_43 = arith.constant 0 : index
    %c0_44 = arith.constant 0 : index
    %c0_45 = arith.constant 0 : index
    %89 = vector.load %arg7[%c0_43, %c0_44, %c0_45] : memref<1x8x256xf32, #tpu.memory_space<vmem>>, vector<1x8x256xf32>
    %90 = vector.shape_cast %89 : vector<1x8x256xf32> to vector<8x256xf32>
    %91 = vector.shape_cast %86 : vector<8x256xf32> to vector<1x8x256xf32>
    tpu.vector_store %arg7[%c0_43, %c0_44, %c0_45], %91 {strides = array<i32>} : memref<1x8x256xf32, #tpu.memory_space<vmem>>, vector<1x8x256xf32>,
    %c0_46 = arith.constant 0 : index
    %c0_47 = arith.constant 0 : index
    %c0_48 = arith.constant 0 : index
    %92 = vector.load %arg6[%c0_46, %c0_47, %c0_48] : memref<1x8x256xf32, #tpu.memory_space<vmem>>, vector<1x8x256xf32>
    %93 = vector.shape_cast %92 : vector<1x8x256xf32> to vector<8x256xf32>
    %94 = vector.shape_cast %88 : vector<8x256xf32> to vector<1x8x256xf32>
    tpu.vector_store %arg6[%c0_46, %c0_47, %c0_48], %94 {strides = array<i32>} : memref<1x8x256xf32, #tpu.memory_space<vmem>>, vector<1x8x256xf32>,
    return
  }
  func.func @transform_0(%arg0: i32) -> (i32, i32, i32) {
    %c0_i32 = arith.constant 0 : i32
    %c0_i32_0 = arith.constant 0 : i32
    %c0_i32_1 = arith.constant 0 : i32
    return %arg0, %c0_i32, %c0_i32_0 : i32, i32, i32
  }
  func.func @transform_1(%arg0: i32) -> (i32, i32) {
    %c0_i32 = arith.constant 0 : i32
    %c0_i32_0 = arith.constant 0 : i32
    %c0_i32_1 = arith.constant 0 : i32
    return %c0_i32, %c0_i32_0 : i32, i32
  }
  func.func @transform_2(%arg0: i32) -> (i32, i32) {
    %c0_i32 = arith.constant 0 : i32
    %c0_i32_0 = arith.constant 0 : i32
    %c0_i32_1 = arith.constant 0 : i32
    return %c0_i32, %c0_i32_0 : i32, i32
  }
  func.func @transform_3(%arg0: i32) -> (i32, i32, i32) {
    %c0_i32 = arith.constant 0 : i32
    %c0_i32_0 = arith.constant 0 : i32
    %c0_i32_1 = arith.constant 0 : i32
    %c0_i32_2 = arith.constant 0 : i32
    return %c0_i32, %c0_i32_0, %c0_i32_1 : i32, i32, i32
  }
  func.func @transform_4(%arg0: i32) -> (i32, i32, i32) {
    %c0_i32 = arith.constant 0 : i32
    %c0_i32_0 = arith.constant 0 : i32
    %c0_i32_1 = arith.constant 0 : i32
    return %arg0, %c0_i32, %c0_i32_0 : i32, i32, i32
  }
  func.func @transform_5(%arg0: i32) -> (i32, i32, i32) {
    %c0_i32 = arith.constant 0 : i32
    %c0_i32_0 = arith.constant 0 : i32
    %c0_i32_1 = arith.constant 0 : i32
    return %arg0, %c0_i32, %c0_i32_0 : i32, i32, i32
  }
  func.func @transform_6(%arg0: i32) -> (i32, i32, i32) {
    %c0_i32 = arith.constant 0 : i32
    %c0_i32_0 = arith.constant 0 : i32
    %c0_i32_1 = arith.constant 0 : i32
    return %arg0, %c0_i32, %c0_i32_0 : i32, i32, i32
  }
}

</mosaic_0001>

<llo_original>
// kernel: tpu_custom_call.1
$region0: #{tpu_custom_call.1}
  #allocation0 [shape = 'u32[]', space=smem, size = 0x4, offset = 0x4, fixed_abs, tag = 'smem constant byte address 0x4 - core index']
  #allocation1 [shape = 'u32[144,128]{1,0:T(1,128)}', space=vmem, size = 0x12000, scoped, tag = 'internal scratch']
  #allocation2 [shape = 'f32[144,256]{1,0:T(8,128)}', space=vmem, size = 0x24000, scoped, tag = 'scratch operand']
  %s0 = inlined_call_operand.hbm [shape: f32[2,16,290], index: 0, kind: input, shape index: {}]
  %s1 = inlined_call_operand.hbm [shape: f32[32,144], index: 1, kind: input, shape index: {}]
  %s2 = inlined_call_operand.vmem [shape: f32[32,1], index: 2, kind: input, shape index: {}]
  %s3 = inlined_call_operand.hbm [shape: f32[9,1,256], index: 3, kind: input, shape index: {}]
  %s4 = inlined_call_operand.vmem [shape: f32[2,8,256], index: 4, kind: input, shape index: {}]
  %s5 = inlined_call_operand.hbm [shape: f32[2,8,256], index: 5, kind: output, shape index: {0}]
  %s6 = inlined_call_operand.hbm [shape: f32[2,8,256], index: 6, kind: output, shape index: {1}]
  %7 = xla_tuple %s5, %s6
  %s8 = sld [smem:[#allocation0]]
  $region73: #{tpu_custom_call.1} parent=0
    _
  %s10 = ssub.s32 1, %s8
  %s11 = scalar_select 0, %s10, %s8
  $region1: #{tpu_custom_call.1} parent=0
    #allocation3 [shape = 'u8[49152]{0}', space=vmem, size = 0xc000, scoped, tag = 'input window, operand 0']
    #allocation4 [shape = 's32[2]{0}', space=sflag, size = 0x8, scoped, tag = 'scoped memory for tpu_custom_call.1']
    #allocation5 [shape = 's32[2]{0}', space=sflag, size = 0x8, scoped, tag = 'scoped memory for tpu_custom_call.1']
    #allocation6 [shape = 'u8[32768]{0}', space=vmem, size = 0x8000, scoped, tag = 'input window, operand 1, single buffered']
    #allocation7 [shape = 's32[1]{0}', space=sflag, size = 0x4, scoped, tag = 'scoped memory for tpu_custom_call.1']
    #allocation8 [shape = 'u8[9216]{0}', space=vmem, size = 0x2400, scoped, tag = 'input window, operand 3, single buffered']
    #allocation9 [shape = 'u8[16384]{0}', space=vmem, size = 0x4000, scoped, tag = 'output window, operand 0']
    #allocation10 [shape = 'u8[16384]{0}', space=vmem, size = 0x4000, scoped, tag = 'output window, operand 1']
    #allocation11 [shape = 's32[2]{0}', space=sflag, size = 0x8, scoped, tag = 'scoped memory for tpu_custom_call.1']
    %12 = vsyncpa [#allocation4], 0
    %s13 = scalar_lea.sflag [#allocation4], 1
    %14 = vsyncpa %s13, 0
    %15 = vsyncpa [#allocation7], 0
    %16 = vsyncpa [#allocation5], 0
    %s17 = scalar_lea.sflag [#allocation5], 1
    %18 = vsyncpa %s17, 0
    %19 = vsyncpa [#allocation11], 0
    %s20 = scalar_lea.sflag [#allocation11], 1
    %21 = vsyncpa %s20, 0
    loop: start=0, step=1, limit=4
    $region2: #{tpu_custom_call.1} parent=1 // loop_pre_header
      _
    $region3: #{tpu_custom_call.1} parent=1 // loop_header
      %s23 = sphi 0, %s27
      %p24 = scmp.ge.s32.totalorder %s23, 4
      %s33 = sphi 0, %s35
      %s36 = sphi 0, %s33
      %s37 = sphi 0, %s36
      %s53 = sphi 0, %s37
      %s57 = sphi 0, %s57
      %s59 = sphi 0, %s57
      %s60 = sphi 0, %s59
      %s74 = sphi 0, %s60
      %s78 = sphi 0, %s78
      %s80 = sphi 0, %s78
      %s81 = sphi 0, %s80
      %s95 = sphi 0, %s81
      %s99 = sphi 0, %s99
      %s101 = sphi 0, %s99
      %s102 = sphi 0, %s101
      %s116 = sphi 0, %s102
      %s122 = sphi 0, %s124
      %s125 = sphi 0, %s122
      %s126 = sphi 0, %s125
      %s142 = sphi 0, %s126
      %s148 = sphi 0, %s150
      %s151 = sphi 0, %s148
      %s152 = sphi 0, %s151
      %s168 = sphi 0, %s152
      %s174 = sphi 0, %s176
      %s177 = sphi 0, %s174
      %s178 = sphi 0, %s177
      %s194 = sphi 0, %s178
    $region4: #{tpu_custom_call.1} parent=1 // loop_header_branch
      %26 = sbr.rel (%p24) target = $region8
    $region5: #{tpu_custom_call.1} parent=1 // loop_body
      %s28 = ssub.s32 %s23, 1
      %s29 = ssub.s32 %s23, 2
      %s30 = sadd.s32 %s23, 1
      %s31 = ssub.s32 %s23, %s30
      %p32 = scmp.eq.s32.totalorder %s31, 0
      %s34 = sadd.s32 %s33, 1
      %s35 = scalar_select %p32, %s33, %s34
      %p38 = pneg %p32
      %p39 = scmp.eq.s32.totalorder %s23, 1
      %p40 = por %p38, %p39
      %p41 = scmp.ne.s32.totalorder %s33, %s36
      %p42 = scmp.eq.s32.totalorder %s23, 0
      %p43 = por %p41, %p42
      %p44 = scmp.ne.s32.totalorder %s33, %s36
      %p45 = scmp.eq.s32.totalorder %s28, 1
      %p46 = por %p44, %p45
      %p47 = scmp.ne.s32.totalorder %s36, %s37
      %p48 = scmp.eq.s32.totalorder %s28, 0
      %p49 = por %p47, %p48
      %p50 = scmp.ne.s32.totalorder %s36, %s37
      %p51 = scmp.eq.s32.totalorder %s29, 1
      %p52 = por %p50, %p51
      %p54 = scmp.ne.s32.totalorder %s37, %s53
      %p55 = scmp.eq.s32.totalorder %s29, 0
      %p56 = por %p54, %p55
      %s58 = sadd.s32 %s57, 1
      %p61 = scmp.eq.s32.totalorder %s23, 1
      %p62 = scmp.ne.s32.totalorder %s57, %s59
      %p63 = scmp.eq.s32.totalorder %s23, 0
      %p64 = por %p62, %p63
      %p65 = scmp.ne.s32.totalorder %s57, %s59
      %p66 = scmp.eq.s32.totalorder %s28, 1
      %p67 = por %p65, %p66
      %p68 = scmp.ne.s32.totalorder %s59, %s60
      %p69 = scmp.eq.s32.totalorder %s28, 0
      %p70 = por %p68, %p69
      %p71 = scmp.ne.s32.totalorder %s59, %s60
      %p72 = scmp.eq.s32.totalorder %s29, 1
      %p73 = por %p71, %p72
      %p75 = scmp.ne.s32.totalorder %s60, %s74
      %p76 = scmp.eq.s32.totalorder %s29, 0
      %p77 = por %p75, %p76
      %s79 = sadd.s32 %s78, 1
      %p82 = scmp.eq.s32.totalorder %s23, 1
      %p83 = scmp.ne.s32.totalorder %s78, %s80
      %p84 = scmp.eq.s32.totalorder %s23, 0
      %p85 = por %p83, %p84
      %p86 = scmp.ne.s32.totalorder %s78, %s80
      %p87 = scmp.eq.s32.totalorder %s28, 1
      %p88 = por %p86, %p87
      %p89 = scmp.ne.s32.totalorder %s80, %s81
      %p90 = scmp.eq.s32.totalorder %s28, 0
      %p91 = por %p89, %p90
      %p92 = scmp.ne.s32.totalorder %s80, %s81
      %p93 = scmp.eq.s32.totalorder %s29, 1
      %p94 = por %p92, %p93
      %p96 = scmp.ne.s32.totalorder %s81, %s95
      %p97 = scmp.eq.s32.totalorder %s29, 0
      %p98 = por %p96, %p97
      %s100 = sadd.s32 %s99, 1
      %p103 = scmp.eq.s32.totalorder %s23, 1
      %p104 = scmp.ne.s32.totalorder %s99, %s101
      %p105 = scmp.eq.s32.totalorder %s23, 0
      %p106 = por %p104, %p105
      %p107 = scmp.ne.s32.totalorder %s99, %s101
      %p108 = scmp.eq.s32.totalorder %s28, 1
      %p109 = por %p107, %p108
      %p110 = scmp.ne.s32.totalorder %s101, %s102
      %p111 = scmp.eq.s32.totalorder %s28, 0
      %p112 = por %p110, %p111
      %p113 = scmp.ne.s32.totalorder %s101, %s102
      %p114 = scmp.eq.s32.totalorder %s29, 1
      %p115 = por %p113, %p114
      %p117 = scmp.ne.s32.totalorder %s102, %s116
      %p118 = scmp.eq.s32.totalorder %s29, 0
      %p119 = por %p117, %p118
      %s120 = ssub.s32 %s23, %s30
      %p121 = scmp.eq.s32.totalorder %s120, 0
      %s123 = sadd.s32 %s122, 1
      %s124 = scalar_select %p121, %s122, %s123
      %p127 = pneg %p121
      %p128 = scmp.eq.s32.totalorder %s23, 1
      %p129 = por %p127, %p128
      %p130 = scmp.ne.s32.totalorder %s122, %s125
      %p131 = scmp.eq.s32.totalorder %s23, 0
      %p132 = por %p130, %p131
      %p133 = scmp.ne.s32.totalorder %s122, %s125
      %p134 = scmp.eq.s32.totalorder %s28, 1
      %p135 = por %p133, %p134
      %p136 = scmp.ne.s32.totalorder %s125, %s126
      %p137 = scmp.eq.s32.totalorder %s28, 0
      %p138 = por %p136, %p137
      %p139 = scmp.ne.s32.totalorder %s125, %s126
      %p140 = scmp.eq.s32.totalorder %s29, 1
      %p141 = por %p139, %p140
      %p143 = scmp.ne.s32.totalorder %s126, %s142
      %p144 = scmp.eq.s32.totalorder %s29, 0
      %p145 = por %p143, %p144
      %s146 = ssub.s32 %s23, %s30
      %p147 = scmp.eq.s32.totalorder %s146, 0
      %s149 = sadd.s32 %s148, 1
      %s150 = scalar_select %p147, %s148, %s149
      %p153 = pneg %p147
      %p154 = scmp.eq.s32.totalorder %s23, 1
      %p155 = por %p153, %p154
      %p156 = scmp.ne.s32.totalorder %s148, %s151
      %p157 = scmp.eq.s32.totalorder %s23, 0
      %p158 = por %p156, %p157
      %p159 = scmp.ne.s32.totalorder %s148, %s151
      %p160 = scmp.eq.s32.totalorder %s28, 1
      %p161 = por %p159, %p160
      %p162 = scmp.ne.s32.totalorder %s151, %s152
      %p163 = scmp.eq.s32.totalorder %s28, 0
      %p164 = por %p162, %p163
      %p165 = scmp.ne.s32.totalorder %s151, %s152
      %p166 = scmp.eq.s32.totalorder %s29, 1
      %p167 = por %p165, %p166
      %p169 = scmp.ne.s32.totalorder %s152, %s168
      %p170 = scmp.eq.s32.totalorder %s29, 0
      %p171 = por %p169, %p170
      %s172 = ssub.s32 %s23, %s30
      %p173 = scmp.eq.s32.totalorder %s172, 0
      %s175 = sadd.s32 %s174, 1
      %s176 = scalar_select %p173, %s174, %s175
      %p179 = pneg %p173
      %p180 = scmp.eq.s32.totalorder %s23, 1
      %p181 = por %p179, %p180
      %p182 = scmp.ne.s32.totalorder %s174, %s177
      %p183 = scmp.eq.s32.totalorder %s23, 0
      %p184 = por %p182, %p183
      %p185 = scmp.ne.s32.totalorder %s174, %s177
      %p186 = scmp.eq.s32.totalorder %s28, 1
      %p187 = por %p185, %p186
      %p188 = scmp.ne.s32.totalorder %s177, %s178
      %p189 = scmp.eq.s32.totalorder %s28, 0
      %p190 = por %p188, %p189
      %p191 = scmp.ne.s32.totalorder %s177, %s178
      %p192 = scmp.eq.s32.totalorder %s29, 1
      %p193 = por %p191, %p192
      %p195 = scmp.ne.s32.totalorder %s178, %s194
      %p196 = scmp.eq.s32.totalorder %s29, 0
      %p197 = por %p195, %p196
      %p198 = scmp.le.s32.totalorder 1, %s23
      %p199 = scmp.lt.s32.totalorder %s23, 3
      %p200 = pnand %p198, %p199
      %p201 = pneg %p200
      // Predicated region
      $region9: #{tpu_custom_call.1} parent=5 // pred_check
        _
      $region10: #{tpu_custom_call.1} parent=5 // pred_check_branch
        %203 = sbr.rel (%p200) target = $region12
      $region11: #{tpu_custom_call.1} parent=5 // pred_region
        %s204 = ssub.s32 %s23, 1
        // Predicated region
        $region13: #{tpu_custom_call.1} parent=11 // pred_check
          %p205 = pneg %p70
        $region14: #{tpu_custom_call.1} parent=11 // pred_check_branch
          %207 = sbr.rel (%p205) target = $region16
        $region15: #{tpu_custom_call.1} parent=11 // pred_region
          %s209 = ssub.s32 1024, 1024
          %210 = vsyncadd [#allocation7], %s209
          %s211 = sshll.u32 [#allocation6], 4
          %s212 = int_to_ptr.vmem [resolvable:$true] %s211
          %217 = dma.hbm_to_vmem [thread:$0]  %s1, 1024, %s212, [#allocation7], 256, 256, 16
        $region16: #{tpu_custom_call.1} parent=11 // pred_fallthru
          _
        // Predicated region
        $region17: #{tpu_custom_call.1} parent=11 // pred_check
          %p218 = pneg %p91
        $region18: #{tpu_custom_call.1} parent=11 // pred_check_branch
          %220 = sbr.rel (%p218) target = $region20
        $region19: #{tpu_custom_call.1} parent=11 // pred_region
          _
        $region20: #{tpu_custom_call.1} parent=11 // pred_fallthru
          _
        // Predicated region
        $region21: #{tpu_custom_call.1} parent=11 // pred_check
          %p221 = pneg %p112
        $region22: #{tpu_custom_call.1} parent=11 // pred_check_branch
          %223 = sbr.rel (%p221) target = $region24
        $region23: #{tpu_custom_call.1} parent=11 // pred_region
          %s225 = ssub.s32 288, 288
          %226 = vsyncadd [#allocation7], %s225
          %s227 = sshll.u32 [#allocation8], 4
          %s228 = int_to_ptr.vmem [resolvable:$true] %s227
          %233 = dma.hbm_to_vmem [thread:$0]  %s3, 288, %s228, [#allocation7], 32, 32, 2
        $region24: #{tpu_custom_call.1} parent=11 // pred_fallthru
          _
      $region12: #{tpu_custom_call.1} parent=5 // pred_fallthru
        _
      %p234 = scmp.lt.s32.totalorder %s23, 2
      // Predicated region
      $region25: #{tpu_custom_call.1} parent=5 // pred_check
        %p235 = pneg %p234
      $region26: #{tpu_custom_call.1} parent=5 // pred_check_branch
        %237 = sbr.rel (%p235) target = $region28
      $region27: #{tpu_custom_call.1} parent=5 // pred_region
        // Predicated region
        $region29: #{tpu_custom_call.1} parent=27 // pred_check
          %p238 = pneg %p43
        $region30: #{tpu_custom_call.1} parent=27 // pred_check_branch
          %240 = sbr.rel (%p238) target = $region32
        $region31: #{tpu_custom_call.1} parent=27 // pred_region
          %s241 = sand.u32 %s33, 1
          %s242 = scalar_lea.sflag [#allocation4], %s241
          %s243 = sand.u32 %s33, 1
          %s244 = smul.addr %s243, 48
          %s245 = scalar_lea.vmem [#allocation3], %s244
          %s247 = ssub.s32 768, 768
          %248 = vsyncadd %s242, %s247
          %s249 = smul.addr %s23, 6
          %s250 = smul.addr %s249, 128
          %s251 = scalar_lea.hbm %s0, %s250
          %s252 = sshll.u32 %s245, 4
          %s253 = int_to_ptr.vmem [resolvable:$true] %s252
          %258 = dma.hbm_to_vmem [thread:$0]  %s251, 768, %s253, %s242, 384, 384, 24
        $region32: #{tpu_custom_call.1} parent=27 // pred_fallthru
          _
        // Predicated region
        $region33: #{tpu_custom_call.1} parent=27 // pred_check
          %p259 = pneg %p132
        $region34: #{tpu_custom_call.1} parent=27 // pred_check_branch
          %261 = sbr.rel (%p259) target = $region36
        $region35: #{tpu_custom_call.1} parent=27 // pred_region
          %p262 = scmp.lt.s32.totalorder %s23, 1
          %s263 = scalar_select %p262, %s23, 1
          %s264 = smul.addr %s263, 2
          %s265 = smul.addr %s264, 8
          %s266 = scalar_lea.vmem %s4, %s265
        $region36: #{tpu_custom_call.1} parent=27 // pred_fallthru
          _
      $region28: #{tpu_custom_call.1} parent=5 // pred_fallthru
        _
      %p267 = scmp.le.s32.totalorder 1, %s23
      %p268 = scmp.lt.s32.totalorder %s23, 3
      %p269 = pnand %p267, %p268
      %p270 = pneg %p269
      // Predicated region
      $region37: #{tpu_custom_call.1} parent=5 // pred_check
        _
      $region38: #{tpu_custom_call.1} parent=5 // pred_check_branch
        %272 = sbr.rel (%p269) target = $region40
      $region39: #{tpu_custom_call.1} parent=5 // pred_region
        %s273 = ssub.s32 %s23, 1
        %s274 = sand.u32 %s36, 1
        %s275 = scalar_lea.sflag [#allocation4], %s274
        %s276 = sand.u32 %s36, 1
        %s277 = smul.addr %s276, 48
        %s278 = scalar_lea.vmem [#allocation3], %s277
        // Predicated region
        $region41: #{tpu_custom_call.1} parent=39 // pred_check
          %p279 = pneg %p49
        $region42: #{tpu_custom_call.1} parent=39 // pred_check_branch
          %281 = sbr.rel (%p279) target = $region44
        $region43: #{tpu_custom_call.1} parent=39 // pred_region
          %282 = dma.done %s275, 768
        $region44: #{tpu_custom_call.1} parent=39 // pred_fallthru
          _
        // Predicated region
        $region45: #{tpu_custom_call.1} parent=39 // pred_check
          %p283 = pneg %p70
        $region46: #{tpu_custom_call.1} parent=39 // pred_check_branch
          %285 = sbr.rel (%p283) target = $region48
        $region47: #{tpu_custom_call.1} parent=39 // pred_region
          %286 = dma.done [#allocation7], 1024
        $region48: #{tpu_custom_call.1} parent=39 // pred_fallthru
          _
        // Predicated region
        $region49: #{tpu_custom_call.1} parent=39 // pred_check
          %p287 = pneg %p112
        $region50: #{tpu_custom_call.1} parent=39 // pred_check_branch
          %289 = sbr.rel (%p287) target = $region52
        $region51: #{tpu_custom_call.1} parent=39 // pred_region
          %290 = dma.done [#allocation7], 288
        $region52: #{tpu_custom_call.1} parent=39 // pred_fallthru
          _
        %s291 = sand.u32 %s36, 1
        %s292 = scalar_lea.sflag [#allocation4], %s291
        %s293 = sand.u32 %s36, 1
        %s294 = smul.addr %s293, 48
        %s295 = scalar_lea.vmem [#allocation3], %s294
        %p296 = pneg %p49
        %p297 = pneg %p46
        %p298 = pneg %p70
        %p299 = pneg %p67
        %p300 = pneg %p91
        %p301 = pneg %p88
        %p302 = pneg %p112
        %p303 = pneg %p109
        %p304 = scmp.lt.s32.totalorder %s28, 1
        %s305 = scalar_select %p304, %s28, 1
        %s306 = smul.addr %s305, 2
        %s307 = smul.addr %s306, 8
        %s308 = scalar_lea.vmem %s4, %s307
        %p309 = pneg %p138
        %p310 = pneg %p135
        %p311 = pneg %p164
        %p312 = pneg %p161
        %s313 = sand.u32 %s151, 1
        %s314 = scalar_lea.sflag [#allocation5], %s313
        %s315 = sand.u32 %s151, 1
        %s316 = smul.addr %s315, 16
        %s317 = scalar_lea.vmem [#allocation9], %s316
        %p318 = pneg %p190
        %p319 = pneg %p187
        %s320 = sand.u32 %s177, 1
        %s321 = scalar_lea.sflag [#allocation11], %s320
        %s322 = sand.u32 %s177, 1
        %s323 = smul.addr %s322, 16
        %s324 = scalar_lea.vmem [#allocation10], %s323
        %p325 = scmp.lt.s32.totalorder %s28, 1
        %s326 = scalar_select %p325, %s28, 1
        %s327 = smul.addr %s326, 2
        %s328 = smul.addr %s327, 8
        %s329 = scalar_lea.vmem %s4, %s328
        %v330 = vld [vmem:[%s278] sm:$0xff]
        %v331 = vld [vmem:[%s278 + $0x8] sm:$0xff]
        %v332 = vld [vmem:[%s278 + $0x10] sm:$0xff]
        %v333 = vld [vmem:[%s278 + $0x18] sm:$0xff]
        %v334 = vld [vmem:[%s278 + $0x20] sm:$0xff]
        %v335 = vld [vmem:[%s278 + $0x28] sm:$0xff]
        %v336 = vld [vmem:[#allocation8] sm:$0x3]
        %v338 = vlaneseq
        %v339 = vshrl.u32 %v338, 7
        %v340 = vsub.s32 0, %v339
        %v341 = vrot.slane %v336, %v340
        %v342 = vlaneseq
        %v343 = vshrl.u32 %v342, 7
        %v344 = vsub.s32 1, %v343
        %v345 = vrot.slane %v336, %v344
        %v348 = vmul.f32 %v330, %v341
        %v349 = vmul.f32 %v331, %v345
        %v350 = vmul.f32 %v333, %v341
        %v351 = vmul.f32 %v334, %v345
        %352 = vst [vmem:[#allocation2] sm:$0xff] %v348
        %353 = vst [vmem:[#allocation2 + $0x8] sm:$0xff] %v349
        %354 = vst [vmem:[#allocation2 + $0x10] sm:$0xff] %v350
        %355 = vst [vmem:[#allocation2 + $0x18] sm:$0xff] %v351
        %s356 = scalar_lea.vmem [#allocation8], 2
        %v357 = vld [vmem:[%s356] sm:$0x3]
        %v359 = vlaneseq
        %v360 = vshrl.u32 %v359, 7
        %v361 = vsub.s32 0, %v360
        %v362 = vrot.slane %v357, %v361
        %v363 = vlaneseq
        %v364 = vshrl.u32 %v363, 7
        %v365 = vsub.s32 1, %v364
        %v366 = vrot.slane %v357, %v365
        %367 = vrot.lane.b32.xlu0 %v362, 1
        %v368 = vpop.permute.xlu0 %367
        %369 = vrot.lane.b32.xlu0 %v366, 1
        %v370 = vpop.permute.xlu0 %369
        %vm371 = vcmask 7168
        %v372 = vsel %vm371, %v368, %v370
        %v376 = vmul.f32 %v330, %v368
        %v377 = vmul.f32 %v331, %v372
        %v378 = vmul.f32 %v332, %v370
        %v379 = vmul.f32 %v333, %v368
        %v380 = vmul.f32 %v334, %v372
        %v381 = vmul.f32 %v335, %v370
        %388 = vrot.lane.b32.xlu0 %v376, 127
        %v389 = vpop.permute.xlu0 %388
        %390 = vrot.lane.b32.xlu0 %v377, 127
        %v391 = vpop.permute.xlu0 %390
        %392 = vrot.lane.b32.xlu0 %v378, 127
        %v393 = vpop.permute.xlu0 %392
        %394 = vrot.lane.b32.xlu0 %v379, 127
        %v395 = vpop.permute.xlu0 %394
        %396 = vrot.lane.b32.xlu0 %v380, 127
        %v397 = vpop.permute.xlu0 %396
        %398 = vrot.lane.b32.xlu0 %v381, 127
        %v399 = vpop.permute.xlu0 %398
        %vm400 = vcmask 1039360
        %v401 = vsel %vm400, %v389, %v391
        %v402 = vsel %vm400, %v391, %v393
        %v403 = vsel %vm400, %v395, %v397
        %v404 = vsel %vm400, %v397, %v399
        %409 = vst [vmem:[#allocation2 + $0x20] sm:$0xff] %v401
        %410 = vst [vmem:[#allocation2 + $0x28] sm:$0xff] %v402
        %411 = vst [vmem:[#allocation2 + $0x30] sm:$0xff] %v403
        %412 = vst [vmem:[#allocation2 + $0x38] sm:$0xff] %v404
        %s413 = scalar_lea.vmem [#allocation8], 4
        %v414 = vld [vmem:[%s413] sm:$0x3]
        %v416 = vlaneseq
        %v417 = vshrl.u32 %v416, 7
        %v418 = vsub.s32 0, %v417
        %v419 = vrot.slane %v414, %v418
        %v420 = vlaneseq
        %v421 = vshrl.u32 %v420, 7
        %v422 = vsub.s32 1, %v421
        %v423 = vrot.slane %v414, %v422
        %424 = vrot.lane.b32.xlu0 %v419, 2
        %v425 = vpop.permute.xlu0 %424
        %426 = vrot.lane.b32.xlu0 %v423, 2
        %v427 = vpop.permute.xlu0 %426
        %vm428 = vcmask 15360
        %v429 = vsel %vm428, %v425, %v427
        %v433 = vmul.f32 %v330, %v425
        %v434 = vmul.f32 %v331, %v429
        %v435 = vmul.f32 %v332, %v427
        %v436 = vmul.f32 %v333, %v425
        %v437 = vmul.f32 %v334, %v429
        %v438 = vmul.f32 %v335, %v427
        %445 = vrot.lane.b32.xlu0 %v433, 126
        %v446 = vpop.permute.xlu0 %445
        %447 = vrot.lane.b32.xlu0 %v434, 126
        %v448 = vpop.permute.xlu0 %447
        %449 = vrot.lane.b32.xlu0 %v435, 126
        %v450 = vpop.permute.xlu0 %449
        %451 = vrot.lane.b32.xlu0 %v436, 126
        %v452 = vpop.permute.xlu0 %451
        %453 = vrot.lane.b32.xlu0 %v437, 126
        %v454 = vpop.permute.xlu0 %453
        %455 = vrot.lane.b32.xlu0 %v438, 126
        %v456 = vpop.permute.xlu0 %455
        %vm457 = vcmask 1031168
        %v458 = vsel %vm457, %v446, %v448
        %v459 = vsel %vm457, %v448, %v450
        %v460 = vsel %vm457, %v452, %v454
        %v461 = vsel %vm457, %v454, %v456
        %466 = vst [vmem:[#allocation2 + $0x40] sm:$0xff] %v458
        %467 = vst [vmem:[#allocation2 + $0x48] sm:$0xff] %v459
        %468 = vst [vmem:[#allocation2 + $0x50] sm:$0xff] %v460
        %469 = vst [vmem:[#allocation2 + $0x58] sm:$0xff] %v461
        %s470 = scalar_lea.vmem [#allocation8], 6
        %v471 = vld [vmem:[%s470] sm:$0x3]
        %v473 = vlaneseq
        %v474 = vshrl.u32 %v473, 7
        %v475 = vsub.s32 0, %v474
        %v476 = vrot.slane %v471, %v475
        %v477 = vlaneseq
        %v478 = vshrl.u32 %v477, 7
        %v479 = vsub.s32 1, %v478
        %v480 = vrot.slane %v471, %v479
        %481 = vrot.lane.b32.xlu0 %v476, 16
        %v482 = vpop.permute.xlu0 %481
        %483 = vrot.lane.b32.xlu0 %v480, 16
        %v484 = vpop.permute.xlu0 %483
        %vm485 = vcmask 130048
        %v486 = vsel %vm485, %v482, %v484
        %v490 = vmul.f32 %v330, %v482
        %v491 = vmul.f32 %v331, %v486
        %v492 = vmul.f32 %v332, %v484
        %v493 = vmul.f32 %v333, %v482
        %v494 = vmul.f32 %v334, %v486
        %v495 = vmul.f32 %v335, %v484
        %502 = vrot.lane.b32.xlu0 %v490, 112
        %v503 = vpop.permute.xlu0 %502
        %504 = vrot.lane.b32.xlu0 %v491, 112
        %v505 = vpop.permute.xlu0 %504
        %506 = vrot.lane.b32.xlu0 %v492, 112
        %v507 = vpop.permute.xlu0 %506
        %508 = vrot.lane.b32.xlu0 %v493, 112
        %v509 = vpop.permute.xlu0 %508
        %510 = vrot.lane.b32.xlu0 %v494, 112
        %v511 = vpop.permute.xlu0 %510
        %512 = vrot.lane.b32.xlu0 %v495, 112
        %v513 = vpop.permute.xlu0 %512
        %vm514 = vcmask 916480
        %v515 = vsel %vm514, %v503, %v505
        %v516 = vsel %vm514, %v505, %v507
        %v517 = vsel %vm514, %v509, %v511
        %v518 = vsel %vm514, %v511, %v513
        %523 = vst [vmem:[#allocation2 + $0x60] sm:$0xff] %v515
        %524 = vst [vmem:[#allocation2 + $0x68] sm:$0xff] %v516
        %525 = vst [vmem:[#allocation2 + $0x70] sm:$0xff] %v517
        %526 = vst [vmem:[#allocation2 + $0x78] sm:$0xff] %v518
        %s527 = scalar_lea.vmem [#allocation8], 8
        %v528 = vld [vmem:[%s527] sm:$0x3]
        %v530 = vlaneseq
        %v531 = vshrl.u32 %v530, 7
        %v532 = vsub.s32 0, %v531
        %v533 = vrot.slane %v528, %v532
        %v534 = vlaneseq
        %v535 = vshrl.u32 %v534, 7
        %v536 = vsub.s32 1, %v535
        %v537 = vrot.slane %v528, %v536
        %538 = vrot.lane.b32.xlu0 %v533, 17
        %v539 = vpop.permute.xlu0 %538
        %540 = vrot.lane.b32.xlu0 %v537, 17
        %v541 = vpop.permute.xlu0 %540
        %vm542 = vcmask 138240
        %v543 = vsel %vm542, %v539, %v541
        %v547 = vmul.f32 %v330, %v539
        %v548 = vmul.f32 %v331, %v543
        %v549 = vmul.f32 %v332, %v541
        %v550 = vmul.f32 %v333, %v539
        %v551 = vmul.f32 %v334, %v543
        %v552 = vmul.f32 %v335, %v541
        %559 = vrot.lane.b32.xlu0 %v547, 111
        %v560 = vpop.permute.xlu0 %559
        %561 = vrot.lane.b32.xlu0 %v548, 111
        %v562 = vpop.permute.xlu0 %561
        %563 = vrot.lane.b32.xlu0 %v549, 111
        %v564 = vpop.permute.xlu0 %563
        %565 = vrot.lane.b32.xlu0 %v550, 111
        %v566 = vpop.permute.xlu0 %565
        %567 = vrot.lane.b32.xlu0 %v551, 111
        %v568 = vpop.permute.xlu0 %567
        %569 = vrot.lane.b32.xlu0 %v552, 111
        %v570 = vpop.permute.xlu0 %569
        %vm571 = vcmask 908288
        %v572 = vsel %vm571, %v560, %v562
        %v573 = vsel %vm571, %v562, %v564
        %v574 = vsel %vm571, %v566, %v568
        %v575 = vsel %vm571, %v568, %v570
        %580 = vst [vmem:[#allocation2 + $0x80] sm:$0xff] %v572
        %581 = vst [vmem:[#allocation2 + $0x88] sm:$0xff] %v573
        %582 = vst [vmem:[#allocation2 + $0x90] sm:$0xff] %v574
        %583 = vst [vmem:[#allocation2 + $0x98] sm:$0xff] %v575
        %s584 = scalar_lea.vmem [#allocation8], 10
        %v585 = vld [vmem:[%s584] sm:$0x3]
        %v587 = vlaneseq
        %v588 = vshrl.u32 %v587, 7
        %v589 = vsub.s32 0, %v588
        %v590 = vrot.slane %v585, %v589
        %v591 = vlaneseq
        %v592 = vshrl.u32 %v591, 7
        %v593 = vsub.s32 1, %v592
        %v594 = vrot.slane %v585, %v593
        %595 = vrot.lane.b32.xlu0 %v590, 18
        %v596 = vpop.permute.xlu0 %595
        %597 = vrot.lane.b32.xlu0 %v594, 18
        %v598 = vpop.permute.xlu0 %597
        %vm599 = vcmask 146432
        %v600 = vsel %vm599, %v596, %v598
        %v604 = vmul.f32 %v330, %v596
        %v605 = vmul.f32 %v331, %v600
        %v606 = vmul.f32 %v332, %v598
        %v607 = vmul.f32 %v333, %v596
        %v608 = vmul.f32 %v334, %v600
        %v609 = vmul.f32 %v335, %v598
        %616 = vrot.lane.b32.xlu0 %v604, 110
        %v617 = vpop.permute.xlu0 %616
        %618 = vrot.lane.b32.xlu0 %v605, 110
        %v619 = vpop.permute.xlu0 %618
        %620 = vrot.lane.b32.xlu0 %v606, 110
        %v621 = vpop.permute.xlu0 %620
        %622 = vrot.lane.b32.xlu0 %v607, 110
        %v623 = vpop.permute.xlu0 %622
        %624 = vrot.lane.b32.xlu0 %v608, 110
        %v625 = vpop.permute.xlu0 %624
        %626 = vrot.lane.b32.xlu0 %v609, 110
        %v627 = vpop.permute.xlu0 %626
        %vm628 = vcmask 900096
        %v629 = vsel %vm628, %v617, %v619
        %v630 = vsel %vm628, %v619, %v621
        %v631 = vsel %vm628, %v623, %v625
        %v632 = vsel %vm628, %v625, %v627
        %637 = vst [vmem:[#allocation2 + $0xa0] sm:$0xff] %v629
        %638 = vst [vmem:[#allocation2 + $0xa8] sm:$0xff] %v630
        %639 = vst [vmem:[#allocation2 + $0xb0] sm:$0xff] %v631
        %640 = vst [vmem:[#allocation2 + $0xb8] sm:$0xff] %v632
        %s641 = scalar_lea.vmem [#allocation8], 12
        %v642 = vld [vmem:[%s641] sm:$0x3]
        %v644 = vlaneseq
        %v645 = vshrl.u32 %v644, 7
        %v646 = vsub.s32 0, %v645
        %v647 = vrot.slane %v642, %v646
        %v648 = vlaneseq
        %v649 = vshrl.u32 %v648, 7
        %v650 = vsub.s32 1, %v649
        %v651 = vrot.slane %v642, %v650
        %652 = vrot.lane.b32.xlu0 %v647, 32
        %v653 = vpop.permute.xlu0 %652
        %654 = vrot.lane.b32.xlu0 %v651, 32
        %v655 = vpop.permute.xlu0 %654
        %vm656 = vcmask 261120
        %v657 = vsel %vm656, %v653, %v655
        %v661 = vmul.f32 %v330, %v653
        %v662 = vmul.f32 %v331, %v657
        %v663 = vmul.f32 %v332, %v655
        %v664 = vmul.f32 %v333, %v653
        %v665 = vmul.f32 %v334, %v657
        %v666 = vmul.f32 %v335, %v655
        %673 = vrot.lane.b32.xlu0 %v661, 96
        %v674 = vpop.permute.xlu0 %673
        %675 = vrot.lane.b32.xlu0 %v662, 96
        %v676 = vpop.permute.xlu0 %675
        %677 = vrot.lane.b32.xlu0 %v663, 96
        %v678 = vpop.permute.xlu0 %677
        %679 = vrot.lane.b32.xlu0 %v664, 96
        %v680 = vpop.permute.xlu0 %679
        %681 = vrot.lane.b32.xlu0 %v665, 96
        %v682 = vpop.permute.xlu0 %681
        %683 = vrot.lane.b32.xlu0 %v666, 96
        %v684 = vpop.permute.xlu0 %683
        %vm685 = vcmask 785408
        %v686 = vsel %vm685, %v674, %v676
        %v687 = vsel %vm685, %v676, %v678
        %v688 = vsel %vm685, %v680, %v682
        %v689 = vsel %vm685, %v682, %v684
        %694 = vst [vmem:[#allocation2 + $0xc0] sm:$0xff] %v686
        %695 = vst [vmem:[#allocation2 + $0xc8] sm:$0xff] %v687
        %696 = vst [vmem:[#allocation2 + $0xd0] sm:$0xff] %v688
        %697 = vst [vmem:[#allocation2 + $0xd8] sm:$0xff] %v689
        %s698 = scalar_lea.vmem [#allocation8], 14
        %v699 = vld [vmem:[%s698] sm:$0x3]
        %v701 = vlaneseq
        %v702 = vshrl.u32 %v701, 7
        %v703 = vsub.s32 0, %v702
        %v704 = vrot.slane %v699, %v703
        %v705 = vlaneseq
        %v706 = vshrl.u32 %v705, 7
        %v707 = vsub.s32 1, %v706
        %v708 = vrot.slane %v699, %v707
        %709 = vrot.lane.b32.xlu0 %v704, 33
        %v710 = vpop.permute.xlu0 %709
        %711 = vrot.lane.b32.xlu0 %v708, 33
        %v712 = vpop.permute.xlu0 %711
        %vm713 = vcmask 269312
        %v714 = vsel %vm713, %v710, %v712
        %v718 = vmul.f32 %v330, %v710
        %v719 = vmul.f32 %v331, %v714
        %v720 = vmul.f32 %v332, %v712
        %v721 = vmul.f32 %v333, %v710
        %v722 = vmul.f32 %v334, %v714
        %v723 = vmul.f32 %v335, %v712
        %730 = vrot.lane.b32.xlu0 %v718, 95
        %v731 = vpop.permute.xlu0 %730
        %732 = vrot.lane.b32.xlu0 %v719, 95
        %v733 = vpop.permute.xlu0 %732
        %734 = vrot.lane.b32.xlu0 %v720, 95
        %v735 = vpop.permute.xlu0 %734
        %736 = vrot.lane.b32.xlu0 %v721, 95
        %v737 = vpop.permute.xlu0 %736
        %738 = vrot.lane.b32.xlu0 %v722, 95
        %v739 = vpop.permute.xlu0 %738
        %740 = vrot.lane.b32.xlu0 %v723, 95
        %v741 = vpop.permute.xlu0 %740
        %vm742 = vcmask 777216
        %v743 = vsel %vm742, %v731, %v733
        %v744 = vsel %vm742, %v733, %v735
        %v745 = vsel %vm742, %v737, %v739
        %v746 = vsel %vm742, %v739, %v741
        %751 = vst [vmem:[#allocation2 + $0xe0] sm:$0xff] %v743
        %752 = vst [vmem:[#allocation2 + $0xe8] sm:$0xff] %v744
        %753 = vst [vmem:[#allocation2 + $0xf0] sm:$0xff] %v745
        %754 = vst [vmem:[#allocation2 + $0xf8] sm:$0xff] %v746
        %s755 = scalar_lea.vmem [#allocation8], 16
        %v756 = vld [vmem:[%s755] sm:$0x3]
        %v758 = vlaneseq
        %v759 = vshrl.u32 %v758, 7
        %v760 = vsub.s32 0, %v759
        %v761 = vrot.slane %v756, %v760
        %v762 = vlaneseq
        %v763 = vshrl.u32 %v762, 7
        %v764 = vsub.s32 1, %v763
        %v765 = vrot.slane %v756, %v764
        %766 = vrot.lane.b32.xlu0 %v761, 34
        %v767 = vpop.permute.xlu0 %766
        %768 = vrot.lane.b32.xlu0 %v765, 34
        %v769 = vpop.permute.xlu0 %768
        %vm770 = vcmask 277504
        %v771 = vsel %vm770, %v767, %v769
        %v775 = vmul.f32 %v330, %v767
        %v776 = vmul.f32 %v331, %v771
        %v777 = vmul.f32 %v332, %v769
        %v778 = vmul.f32 %v333, %v767
        %v779 = vmul.f32 %v334, %v771
        %v780 = vmul.f32 %v335, %v769
        %787 = vrot.lane.b32.xlu0 %v775, 94
        %v788 = vpop.permute.xlu0 %787
        %789 = vrot.lane.b32.xlu0 %v776, 94
        %v790 = vpop.permute.xlu0 %789
        %791 = vrot.lane.b32.xlu0 %v777, 94
        %v792 = vpop.permute.xlu0 %791
        %793 = vrot.lane.b32.xlu0 %v778, 94
        %v794 = vpop.permute.xlu0 %793
        %795 = vrot.lane.b32.xlu0 %v779, 94
        %v796 = vpop.permute.xlu0 %795
        %797 = vrot.lane.b32.xlu0 %v780, 94
        %v798 = vpop.permute.xlu0 %797
        %vm799 = vcmask 769024
        %v800 = vsel %vm799, %v788, %v790
        %v801 = vsel %vm799, %v790, %v792
        %v802 = vsel %vm799, %v794, %v796
        %v803 = vsel %vm799, %v796, %v798
        %808 = vst [vmem:[#allocation2 + $0x100] sm:$0xff] %v800
        %809 = vst [vmem:[#allocation2 + $0x108] sm:$0xff] %v801
        %810 = vst [vmem:[#allocation2 + $0x110] sm:$0xff] %v802
        %811 = vst [vmem:[#allocation2 + $0x118] sm:$0xff] %v803
        %v812 = vld [vmem:[#allocation6] sm:$0xff]
        %v813 = vld [vmem:[#allocation6 + $0x8] sm:$0xff]
        %v814 = vld [vmem:[#allocation6 + $0x10] sm:$0xff]
        %v815 = vld [vmem:[#allocation6 + $0x18] sm:$0xff]
        %v816 = vld [vmem:[#allocation6 + $0x20] sm:$0xff]
        %v817 = vld [vmem:[#allocation6 + $0x28] sm:$0xff]
        %v818 = vld [vmem:[#allocation6 + $0x30] sm:$0xff]
        %v819 = vld [vmem:[#allocation6 + $0x38] sm:$0xff]
        %v820 = vld [vmem:[#allocation2] sm:$0xff]
        %v821 = vld [vmem:[#allocation2 + $0x8] sm:$0xff]
        %v822 = vld [vmem:[#allocation2 + $0x10] sm:$0xff]
        %v823 = vld [vmem:[#allocation2 + $0x18] sm:$0xff]
        %v824 = vld [vmem:[#allocation2 + $0x20] sm:$0xff]
        %v825 = vld [vmem:[#allocation2 + $0x28] sm:$0xff]
        %v826 = vld [vmem:[#allocation2 + $0x30] sm:$0xff]
        %v827 = vld [vmem:[#allocation2 + $0x38] sm:$0xff]
        %v828 = vld [vmem:[#allocation2 + $0x40] sm:$0xff]
        %v829 = vld [vmem:[#allocation2 + $0x48] sm:$0xff]
        %v830 = vld [vmem:[#allocation2 + $0x50] sm:$0xff]
        %v831 = vld [vmem:[#allocation2 + $0x58] sm:$0xff]
        %v832 = vld [vmem:[#allocation2 + $0x60] sm:$0xff]
        %v833 = vld [vmem:[#allocation2 + $0x68] sm:$0xff]
        %v834 = vld [vmem:[#allocation2 + $0x70] sm:$0xff]
        %v835 = vld [vmem:[#allocation2 + $0x78] sm:$0xff]
        %v836 = vld [vmem:[#allocation2 + $0x80] sm:$0xff]
        %v837 = vld [vmem:[#allocation2 + $0x88] sm:$0xff]
        %v838 = vld [vmem:[#allocation2 + $0x90] sm:$0xff]
        %v839 = vld [vmem:[#allocation2 + $0x98] sm:$0xff]
        %v840 = vld [vmem:[#allocation2 + $0xa0] sm:$0xff]
        %v841 = vld [vmem:[#allocation2 + $0xa8] sm:$0xff]
        %v842 = vld [vmem:[#allocation2 + $0xb0] sm:$0xff]
        %v843 = vld [vmem:[#allocation2 + $0xb8] sm:$0xff]
        %v844 = vld [vmem:[#allocation2 + $0xc0] sm:$0xff]
        %v845 = vld [vmem:[#allocation2 + $0xc8] sm:$0xff]
        %v846 = vld [vmem:[#allocation2 + $0xd0] sm:$0xff]
        %v847 = vld [vmem:[#allocation2 + $0xd8] sm:$0xff]
        %v848 = vld [vmem:[#allocation2 + $0xe0] sm:$0xff]
        %v849 = vld [vmem:[#allocation2 + $0xe8] sm:$0xff]
        %v850 = vld [vmem:[#allocation2 + $0xf0] sm:$0xff]
        %v851 = vld [vmem:[#allocation2 + $0xf8] sm:$0xff]
        %v852 = vld [vmem:[#allocation2 + $0x100] sm:$0xff]
        %v853 = vld [vmem:[#allocation2 + $0x108] sm:$0xff]
        %v854 = vld [vmem:[#allocation2 + $0x110] sm:$0xff]
        %v855 = vld [vmem:[#allocation2 + $0x118] sm:$0xff]
        %v856 = vld [vmem:[%s2] sm:$0xff]
        %v857 = vld [vmem:[%s2 + $0x8] sm:$0xff]
        %v858 = vld [vmem:[%s2 + $0x10] sm:$0xff]
        %v859 = vld [vmem:[%s2 + $0x18] sm:$0xff]
        %861 = vset.pattern.permute.xlu0 0
        %862 = vperm.xlu0 %861, %v856
        %v863 = vpop.permute.xlu0 %862
        %866 = vset.pattern.permute.xlu0 0
        %867 = vperm.xlu0 %866, %v857
        %v868 = vpop.permute.xlu0 %867
        %871 = vset.pattern.permute.xlu0 0
        %872 = vperm.xlu0 %871, %v858
        %v873 = vpop.permute.xlu0 %872
        %876 = vset.pattern.permute.xlu0 0
        %877 = vperm.xlu0 %876, %v859
        %v878 = vpop.permute.xlu0 %877
        %v881 = vsel %vm485, %v813, 0
        %v884 = vsel %vm485, %v815, 0
        %v887 = vsel %vm485, %v817, 0
        %v890 = vsel %vm485, %v819, 0
        %892 = vmatprep.subr.mxu0 %v851
        %893 = vmatpush1.msra.mxu0 %v850
        %894 = vmatprep.subr.mxu0 %v849
        %895 = vmatpush1.msra.mxu0 %v848
        %896 = vmatprep.subr.mxu0 %v847
        %897 = vmatpush1.msra.mxu0 %v846
        %898 = vmatprep.subr.mxu0 %v845
        %899 = vmatpush1.msra.mxu0 %v844
        %900 = vmatprep.subr.mxu0 %v843
        %901 = vmatpush1.msra.mxu0 %v842
        %902 = vmatprep.subr.mxu0 %v841
        %903 = vmatpush1.msra.mxu0 %v840
        %904 = vmatprep.subr.mxu0 %v839
        %905 = vmatpush1.msra.mxu0 %v838
        %906 = vmatprep.subr.mxu0 %v837
        %907 = vmatpush1.msra.mxu0 %v836
        %908 = vmatprep.subr.mxu0 %v835
        %909 = vmatpush1.msra.mxu0 %v834
        %910 = vmatprep.subr.mxu0 %v833
        %911 = vmatpush1.msra.mxu0 %v832
        %912 = vmatprep.subr.mxu0 %v831
        %913 = vmatpush1.msra.mxu0 %v830
        %914 = vmatprep.subr.mxu0 %v829
        %915 = vmatpush1.msra.mxu0 %v828
        %916 = vmatprep.subr.mxu0 %v827
        %917 = vmatpush1.msra.mxu0 %v826
        %918 = vmatprep.subr.mxu0 %v825
        %919 = vmatpush1.msra.mxu0 %v824
        %920 = vmatprep.subr.mxu0 %v823
        %921 = vmatpush1.msra.mxu0 %v822
        %922 = vmatprep.subr.mxu0 %v821
        %923 = vmatpush1.msra.mxu0 %v820
        %924 = vmatprep.subr.mxu0 0.0
        %925 = vmatpush2.msra.mxu0 0.0
        %926 = vmatprep.subr.mxu0 0.0
        %927 = vmatpush2.msra.mxu0 0.0
        %928 = vmatprep.subr.mxu0 0.0
        %929 = vmatpush2.msra.mxu0 0.0
        %930 = vmatprep.subr.mxu0 0.0
        %931 = vmatpush2.msra.mxu0 0.0
        %932 = vmatprep.subr.mxu0 0.0
        %933 = vmatpush2.msra.mxu0 0.0
        %934 = vmatprep.subr.mxu0 0.0
        %935 = vmatpush2.msra.mxu0 0.0
        %936 = vmatprep.subr.mxu0 0.0
        %937 = vmatpush2.msra.mxu0 0.0
        %938 = vmatprep.subr.mxu0 0.0
        %939 = vmatpush2.msra.mxu0 0.0
        %940 = vmatprep.subr.mxu0 0.0
        %941 = vmatpush2.msra.mxu0 0.0
        %942 = vmatprep.subr.mxu0 0.0
        %943 = vmatpush2.msra.mxu0 0.0
        %944 = vmatprep.subr.mxu0 0.0
        %945 = vmatpush2.msra.mxu0 0.0
        %946 = vmatprep.subr.mxu0 0.0
        %947 = vmatpush2.msra.mxu0 0.0
        %948 = vmatprep.subr.mxu0 0.0
        %949 = vmatpush2.msra.mxu0 0.0
        %950 = vmatprep.subr.mxu0 0.0
        %951 = vmatpush2.msra.mxu0 0.0
        %952 = vmatprep.subr.mxu0 %v855
        %953 = vmatpush2.msra.mxu0 %v854
        %954 = vmatprep.subr.mxu0 %v853
        %955 = vmatpush2.msra.mxu0 %v852
        %956 = vmatprep.mubr.f32.mxu0 %v881
        %957 = vmatmul.mubr.f32.gmra.mxu0 %v812
        %v958 = vpop.f32.mrf.mxu0
        %v959 = vadd.f32 %v863, %v958
        %v960 = vpop.f32.mrf.mxu0
        %v961 = vadd.f32 %v863, %v960
        %962 = vmatprep.mubr.f32.mxu0 %v884
        %963 = vmatmul.mubr.f32.gmra.mxu0 %v814
        %v964 = vpop.f32.mrf.mxu0
        %v965 = vadd.f32 %v868, %v964
        %v966 = vpop.f32.mrf.mxu0
        %v967 = vadd.f32 %v868, %v966
        %968 = vmatprep.mubr.f32.mxu0 %v887
        %969 = vmatmul.mubr.f32.gmra.mxu0 %v816
        %v970 = vpop.f32.mrf.mxu0
        %v971 = vadd.f32 %v873, %v970
        %v972 = vpop.f32.mrf.mxu0
        %v973 = vadd.f32 %v873, %v972
        %974 = vmatprep.mubr.f32.mxu0 %v890
        %975 = vmatmul.mubr.f32.gmra.mxu0 %v818
        %v976 = vpop.f32.mrf.mxu0
        %v977 = vadd.f32 %v878, %v976
        %v978 = vpop.f32.mrf.mxu0
        %v979 = vadd.f32 %v878, %v978
        %980 = vdwg.mxu0
        %v981 = vxor.u32 %v959, 2147483648
        %v982 = vxor.u32 %v961, 2147483648
        %v983 = vmul.f32 %v981, 1.442695
        %v984 = vpow.pop %v983
        %v985 = vmul.f32 %v982, 1.442695
        %v986 = vpow.pop %v985
        %v987 = vadd.f32 %v984, 1.0
        %v988 = vadd.f32 %v986, 1.0
        %v989 = vrcp.pop %v987
        %v990 = vmul.f32 1.0, %v989
        %v991 = vrcp.pop %v988
        %v992 = vmul.f32 1.0, %v991
        %v993 = vxor.u32 %v965, 2147483648
        %v994 = vxor.u32 %v967, 2147483648
        %v995 = vmul.f32 %v993, 1.442695
        %v996 = vpow.pop %v995
        %v997 = vmul.f32 %v994, 1.442695
        %v998 = vpow.pop %v997
        %v999 = vadd.f32 %v996, 1.0
        %v1000 = vadd.f32 %v998, 1.0
        %v1001 = vrcp.pop %v999
        %v1002 = vmul.f32 1.0, %v1001
        %v1003 = vrcp.pop %v1000
        %v1004 = vmul.f32 1.0, %v1003
        %v1005 = vxor.u32 %v971, 2147483648
        %v1006 = vxor.u32 %v973, 2147483648
        %v1007 = vmul.f32 %v1005, 1.442695
        %v1008 = vpow.pop %v1007
        %v1009 = vmul.f32 %v1006, 1.442695
        %v1010 = vpow.pop %v1009
        %v1011 = vadd.f32 %v1008, 1.0
        %v1012 = vadd.f32 %v1010, 1.0
        %v1013 = vrcp.pop %v1011
        %v1014 = vmul.f32 1.0, %v1013
        %v1015 = vrcp.pop %v1012
        %v1016 = vmul.f32 1.0, %v1015
        %v1017 = vtanh.pop %v977
        %v1018 = vtanh.pop %v979
        %v1019 = vld [vmem:[%s329] sm:$0xff]
        %v1020 = vld [vmem:[%s329 + $0x8] sm:$0xff]
        %v1021 = vmul.f32 %v1002, %v1019
        %v1022 = vmul.f32 %v1004, %v1020
        %v1023 = vmul.f32 %v990, %v1017
        %v1024 = vmul.f32 %v992, %v1018
        %v1025 = vadd.f32 %v1021, %v1023
        %v1026 = vadd.f32 %v1022, %v1024
        %v1027 = vtanh.pop %v1025
        %v1028 = vtanh.pop %v1026
        %v1029 = vmul.f32 %v1014, %v1027
        %v1030 = vmul.f32 %v1016, %v1028
        %1031 = vst [vmem:[%s324] sm:$0xff] %v1025
        %1032 = vst [vmem:[%s324 + $0x8] sm:$0xff] %v1026
        %1033 = vst [vmem:[%s317] sm:$0xff] %v1029
        %1034 = vst [vmem:[%s317 + $0x8] sm:$0xff] %v1030
        %s1035 = sand.u32 %s151, 1
        %s1036 = scalar_lea.sflag [#allocation5], %s1035
        %s1037 = sand.u32 %s151, 1
        %s1038 = smul.addr %s1037, 16
        %s1039 = scalar_lea.vmem [#allocation9], %s1038
        %s1040 = sand.u32 %s177, 1
        %s1041 = scalar_lea.sflag [#allocation11], %s1040
        %s1042 = sand.u32 %s177, 1
        %s1043 = smul.addr %s1042, 16
        %s1044 = scalar_lea.vmem [#allocation10], %s1043
        // Predicated region
        $region53: #{tpu_custom_call.1} parent=39 // pred_check
          %p1045 = pneg %p161
        $region54: #{tpu_custom_call.1} parent=39 // pred_check_branch
          %1047 = sbr.rel (%p1045) target = $region56
        $region55: #{tpu_custom_call.1} parent=39 // pred_region
          %s1049 = ssub.s32 256, 256
          %1050 = vsyncadd %s1036, %s1049
          %s1051 = smul.addr %s28, 2
          %s1052 = smul.addr %s1051, 128
          %s1053 = scalar_lea.hbm %s5, %s1052
          %s1055 = sshll.u32 %s1039, 4
          %s1056 = int_to_ptr.vmem [resolvable:$true] %s1055
          %1058 = dma.vmem_to_hbm [thread:$0]  %s1056, 256, %s1053, %s1036
        $region56: #{tpu_custom_call.1} parent=39 // pred_fallthru
          _
        // Predicated region
        $region57: #{tpu_custom_call.1} parent=39 // pred_check
          %p1059 = pneg %p187
        $region58: #{tpu_custom_call.1} parent=39 // pred_check_branch
          %1061 = sbr.rel (%p1059) target = $region60
        $region59: #{tpu_custom_call.1} parent=39 // pred_region
          %s1063 = ssub.s32 256, 256
          %1064 = vsyncadd %s1041, %s1063
          %s1065 = smul.addr %s28, 2
          %s1066 = smul.addr %s1065, 128
          %s1067 = scalar_lea.hbm %s6, %s1066
          %s1069 = sshll.u32 %s1044, 4
          %s1070 = int_to_ptr.vmem [resolvable:$true] %s1069
          %1072 = dma.vmem_to_hbm [thread:$0]  %s1070, 256, %s1067, %s1041
        $region60: #{tpu_custom_call.1} parent=39 // pred_fallthru
          _
      $region40: #{tpu_custom_call.1} parent=5 // pred_fallthru
        _
      %p1073 = scmp.le.s32.totalorder 2, %s23
      // Predicated region
      $region61: #{tpu_custom_call.1} parent=5 // pred_check
        %p1074 = pneg %p1073
      $region62: #{tpu_custom_call.1} parent=5 // pred_check_branch
        %1076 = sbr.rel (%p1074) target = $region64
      $region63: #{tpu_custom_call.1} parent=5 // pred_region
        %s1077 = ssub.s32 %s23, 2
        // Predicated region
        $region65: #{tpu_custom_call.1} parent=63 // pred_check
          %p1078 = pneg %p167
        $region66: #{tpu_custom_call.1} parent=63 // pred_check_branch
          %1080 = sbr.rel (%p1078) target = $region68
        $region67: #{tpu_custom_call.1} parent=63 // pred_region
          %s1081 = sand.u32 %s152, 1
          %s1082 = scalar_lea.sflag [#allocation5], %s1081
          %s1083 = sand.u32 %s152, 1
          %s1084 = smul.addr %s1083, 16
          %s1085 = scalar_lea.vmem [#allocation9], %s1084
          %1086 = dma.done %s1082, 256
        $region68: #{tpu_custom_call.1} parent=63 // pred_fallthru
          _
        // Predicated region
        $region69: #{tpu_custom_call.1} parent=63 // pred_check
          %p1087 = pneg %p193
        $region70: #{tpu_custom_call.1} parent=63 // pred_check_branch
          %1089 = sbr.rel (%p1087) target = $region72
        $region71: #{tpu_custom_call.1} parent=63 // pred_region
          %s1090 = sand.u32 %s178, 1
          %s1091 = scalar_lea.sflag [#allocation11], %s1090
          %s1092 = sand.u32 %s178, 1
          %s1093 = smul.addr %s1092, 16
          %s1094 = scalar_lea.vmem [#allocation10], %s1093
          %1095 = dma.done %s1091, 256
        $region72: #{tpu_custom_call.1} parent=63 // pred_fallthru
          _
      $region64: #{tpu_custom_call.1} parent=5 // pred_fallthru
        _
    $region6: #{tpu_custom_call.1} parent=1 // loop_footer
      %s27 = sadd.s32 1, %s23
    $region7: #{tpu_custom_call.1} parent=1 // loop_footer_branch
      %22 = sbr.rel target = $region3
    $region8: #{tpu_custom_call.1} parent=1 // loop_exit
      _
    %1096 = vsyncpa [#allocation4], 1
    %s1097 = scalar_lea.sflag [#allocation4], 1
    %1098 = vsyncpa %s1097, 1
    %1099 = vsyncpa [#allocation7], 1
    %1100 = vsyncpa [#allocation5], 1
    %s1101 = scalar_lea.sflag [#allocation5], 1
    %1102 = vsyncpa %s1101, 1
    %1103 = vsyncpa [#allocation11], 1
    %s1104 = scalar_lea.sflag [#allocation11], 1
    %1105 = vsyncpa %s1104, 1

</llo_original>
